<compile_context>
chip_gen: v5e
topology: v5e:2x2
jax: 0.10.0
libtpu: 0.0.40
codegen_flags: <defaults>
</compile_context>

<pallas_src>
import functools

import jax
import jax.numpy as jnp
from jax.experimental import pallas as pl
from jax.experimental.pallas import tpu as pltpu


def _mse_reduce_kernel(x_ref, t_ref, o_ref, acc_ref, *, scale):
    i = pl.program_id(0)

    @pl.when(i == 0)
    def _():
        acc_ref[...] = jnp.zeros_like(acc_ref)

    d = x_ref[...].astype(jnp.float32) - t_ref[...].astype(jnp.float32)
    acc_ref[...] += jnp.sum(d * d, keepdims=True)  # (1, 1) partial sum, f32 accumulation

    @pl.when(i == pl.num_programs(0) - 1)
    def _():
        o_ref[...] = (acc_ref[...] * scale).astype(o_ref.dtype)


def _sq_err_kernel(x_ref, t_ref, o_ref):
    d = x_ref[...].astype(jnp.float32) - t_ref[...].astype(jnp.float32)
    o_ref[...] = (d * d).astype(o_ref.dtype)


def _as_2d(a):
    if a.ndim == 0:
        return a.reshape(1, 1)
    if a.ndim == 1:
        return a.reshape(1, -1)
    return a.reshape(-1, a.shape[-1])


def _pick_row_tile(rows, cols, dtype_bytes, vmem_budget_bytes=8 * 1024 * 1024,
                   max_tile_rows=512):
    """Largest multiple-of-8 row tile that divides `rows` and fits the VMEM budget
    (2 inputs x 2 pipeline buffers).  Falls back to the full row count (always a
    legal block since block == full array dim)."""
    if rows % 8 != 0:
        return rows
    budget_rows = max(8, vmem_budget_bytes // (4 * cols * dtype_bytes))
    tb = max(8, min(rows, max_tile_rows, (budget_rows // 8) * 8))
    while rows % tb != 0:
        tb -= 8
    return tb


def surrogate_loss(weights, input, target, reduction="mean"):
    """Pallas TPU implementation of SurrogateLoss_.forward.

    Matches torch:  F.mse_loss(input, target, reduction=reduction).
    `weights` is accepted for signature parity and ignored, exactly like the
    reference forward.
    """
    del weights  # unused by the reference forward
    assert input.shape == target.shape, (input.shape, target.shape)

    x2 = _as_2d(input)
    t2 = _as_2d(target)
    rows, cols = x2.shape
    n = x2.size

    tb = _pick_row_tile(rows, cols, x2.dtype.itemsize)
    grid = (rows // tb,)
    itemsize = x2.dtype.itemsize
    cparams = pltpu.CompilerParams
    # Explicit VMEM limit: safe on v5e/v6e (128 MiB physical) and v7x (64 MiB).
    vmem_limit = 32 * 1024 * 1024

    if reduction == "none":
        out = pl.pallas_call(
            _sq_err_kernel,
            out_shape=jax.ShapeDtypeStruct((rows, cols), input.dtype),
            grid=grid,
            in_specs=[pl.BlockSpec((tb, cols), lambda i: (i, 0)),
                      pl.BlockSpec((tb, cols), lambda i: (i, 0))],
            out_specs=pl.BlockSpec((tb, cols), lambda i: (i, 0)),
            compiler_params=cparams(dimension_semantics=("parallel",),
                                    vmem_limit_bytes=vmem_limit),
            cost_estimate=pl.CostEstimate(flops=2 * n, transcendentals=0,
                                          bytes_accessed=3 * n * itemsize),
        )(x2, t2)
        return out.reshape(input.shape)

    assert reduction in ("mean", "sum"), reduction
    scale = (1.0 / n) if reduction == "mean" else 1.0

    out = pl.pallas_call(
        functools.partial(_mse_reduce_kernel, scale=scale),
        out_shape=jax.ShapeDtypeStruct((1, 1), jnp.float32),
        grid=grid,
        in_specs=[pl.BlockSpec((tb, cols), lambda i: (i, 0)),
                  pl.BlockSpec((tb, cols), lambda i: (i, 0))],
        # Output block index is constant across the (reduction) grid axis, so the
        # (1, 1) result stays VMEM-resident and is written once at the end.
        out_specs=pl.BlockSpec((1, 1), lambda i: (0, 0)),
        scratch_shapes=[pltpu.VMEM((1, 1), jnp.float32)],
        compiler_params=cparams(dimension_semantics=("arbitrary",),
                                vmem_limit_bytes=vmem_limit),
        cost_estimate=pl.CostEstimate(flops=3 * n, transcendentals=0,
                                      bytes_accessed=2 * n * itemsize + 4),
    )(x2, t2)
    # PyTorch returns a 0-d scalar tensor for 'mean'/'sum'.
    return out[0, 0].astype(input.dtype)


if __name__ == "__main__":
    key = jax.random.PRNGKey(0)
    kw, ki, kt, ko = jax.random.split(key, 4)

    rows, cols = 2048, 256  # grid of 4 row-tiles of 512 -> exercises pipelined accumulation
    weights = jax.random.normal(kw, (4, 8), jnp.float32)  # ignored, like the reference
    inp = jax.random.normal(ki, (rows, cols), jnp.float32)
    tgt = jax.random.normal(kt, (rows, cols), jnp.float32)

    # default reduction='mean'
    loss = jax.block_until_ready(surrogate_loss(weights, inp, tgt))
    ref = jnp.mean((inp - tgt) ** 2)
    assert loss.shape == (), loss.shape
    assert jnp.allclose(loss, ref, atol=1e-5, rtol=1e-5), (loss, ref)

    # 'sum' reduction
    loss_sum = jax.block_until_ready(surrogate_loss(weights, inp, tgt, reduction="sum"))
    assert jnp.allclose(loss_sum, jnp.sum((inp - tgt) ** 2), rtol=1e-5), loss_sum

    # 'none' reduction (elementwise squared error)
    loss_none = jax.block_until_ready(surrogate_loss(weights, inp, tgt, reduction="none"))
    assert loss_none.shape == inp.shape
    assert jnp.allclose(loss_none, (inp - tgt) ** 2, atol=1e-6, rtol=1e-6)

    # odd, non-(8,128)-aligned shape -> full-block fallback path
    a = jax.random.normal(ko, (5, 7), jnp.float32)
    b = a * 0.5
    loss_odd = jax.block_until_ready(surrogate_loss(weights, a, b))
    assert jnp.allclose(loss_odd, jnp.mean((a - b) ** 2), atol=1e-6, rtol=1e-6)

    print("KERNEL_OK")
</pallas_src>

<mosaic_0001>
module attributes {stable_mosaic.version = 11 : i64} {
  func.func @_mse_reduce_kernel(%arg0: i32, %arg1: memref<512x256xf32, #tpu.memory_space<vmem>>, %arg2: memref<512x256xf32, #tpu.memory_space<vmem>>, %arg3: memref<1x1xf32, #tpu.memory_space<vmem>>, %arg4: memref<1x1xf32, #tpu.memory_space<vmem>>) attributes {dimension_semantics = [#tpu.dimension_semantics<arbitrary>], iteration_bounds = array<i64: 4>, scalar_prefetch = 0 : i64, scratch_operands = 1 : i64, tpu.core_type = #tpu.core_type<tc>, window_params = [{transform_indices = @transform_0, window_bounds = array<i64: 512, 256>}, {transform_indices = @transform_1, window_bounds = array<i64: 512, 256>}, {pipeline_mode = #tpu.pipeline_mode<synchronous>, transform_indices = @transform_2, window_bounds = array<i64: 1, 1>}]} {
    %c0_i32 = arith.constant 0 : i32
    %0 = arith.cmpi eq, %arg0, %c0_i32 : i32
    %1 = arith.extui %0 : i1 to i32
    %c0_i32_0 = arith.constant 0 : i32
    %2 = arith.cmpi ne, %1, %c0_i32_0 : i32
    scf.if %2 {
      %cst_9 = arith.constant 0.000000e+00 : f32
      %18 = vector.broadcast %cst_9 : f32 to vector<1x1xf32>
      %c0_10 = arith.constant 0 : index
      %c0_11 = arith.constant 0 : index
      %19 = vector.load %arg4[%c0_10, %c0_11] : memref<1x1xf32, #tpu.memory_space<vmem>>, vector<1x1xf32>
      tpu.vector_store %arg4[%c0_10, %c0_11], %18 {strides = array<i32>} : memref<1x1xf32, #tpu.memory_space<vmem>>, vector<1x1xf32>,
    } else {
    }
    %c0 = arith.constant 0 : index
    %c0_1 = arith.constant 0 : index
    %3 = vector.load %arg1[%c0, %c0_1] : memref<512x256xf32, #tpu.memory_space<vmem>>, vector<512x256xf32>
    %c0_2 = arith.constant 0 : index
    %c0_3 = arith.constant 0 : index
    %4 = vector.load %arg2[%c0_2, %c0_3] : memref<512x256xf32, #tpu.memory_space<vmem>>, vector<512x256xf32>
    %5 = arith.subf %3, %4 : vector<512x256xf32>
    %c0_4 = arith.constant 0 : index
    %c0_5 = arith.constant 0 : index
    %6 = vector.load %arg4[%c0_4, %c0_5] : memref<1x1xf32, #tpu.memory_space<vmem>>, vector<1x1xf32>
    %7 = arith.mulf %5, %5 : vector<512x256xf32>
    %8 = vector.shape_cast %7 : vector<512x256xf32> to vector<1x512x256xf32>
    %cst = arith.constant dense<0.000000e+00> : vector<1xf32>
    %9 = vector.multi_reduction <add>, %8, %cst [1, 2] : vector<1x512x256xf32> to vector<1xf32>
    %10 = vector.shape_cast %9 : vector<1xf32> to vector<1x1x1xf32>
    %11 = vector.extract %10[0, 0, 0] : f32 from vector<1x1x1xf32>
    %12 = vector.broadcast %11 : f32 to vector<1x1xf32>
    %13 = arith.addf %6, %12 : vector<1x1xf32>
    %c0_6 = arith.constant 0 : index
    %c0_7 = arith.constant 0 : index
    %14 = vector.load %arg4[%c0_6, %c0_7] : memref<1x1xf32, #tpu.memory_space<vmem>>, vector<1x1xf32>
    tpu.vector_store %arg4[%c0_6, %c0_7], %13 {strides = array<i32>} : memref<1x1xf32, #tpu.memory_space<vmem>>, vector<1x1xf32>,
    %c3_i32 = arith.constant 3 : i32
    %15 = arith.cmpi eq, %arg0, %c3_i32 : i32
    %16 = arith.extui %15 : i1 to i32
    %c0_i32_8 = arith.constant 0 : i32
    %17 = arith.cmpi ne, %16, %c0_i32_8 : i32
    scf.if %17 {
      %c0_9 = arith.constant 0 : index
      %c0_10 = arith.constant 0 : index
      %18 = vector.load %arg4[%c0_9, %c0_10] : memref<1x1xf32, #tpu.memory_space<vmem>>, vector<1x1xf32>
      %cst_11 = arith.constant 1.90734863E-6 : f32
      %19 = vector.broadcast %cst_11 : f32 to vector<1x1xf32>
      %20 = arith.mulf %18, %19 : vector<1x1xf32>
      %c0_12 = arith.constant 0 : index
      %c0_13 = arith.constant 0 : index
      %21 = vector.load %arg3[%c0_12, %c0_13] : memref<1x1xf32, #tpu.memory_space<vmem>>, vector<1x1xf32>
      tpu.vector_store %arg3[%c0_12, %c0_13], %20 {strides = array<i32>} : memref<1x1xf32, #tpu.memory_space<vmem>>, vector<1x1xf32>,
    } else {
    }
    return
  }
  func.func @transform_0(%arg0: i32) -> (i32, i32) {
    %c0_i32 = arith.constant 0 : i32
    %c0_i32_0 = arith.constant 0 : i32
    return %arg0, %c0_i32 : i32, i32
  }
  func.func @transform_1(%arg0: i32) -> (i32, i32) {
    %c0_i32 = arith.constant 0 : i32
    %c0_i32_0 = arith.constant 0 : i32
    return %arg0, %c0_i32 : i32, i32
  }
  func.func @transform_2(%arg0: i32) -> (i32, i32) {
    %c0_i32 = arith.constant 0 : i32
    %c0_i32_0 = arith.constant 0 : i32
    %c0_i32_1 = arith.constant 0 : i32
    return %c0_i32, %c0_i32_0 : i32, i32
  }
}

</mosaic_0001>

<llo_original>
// kernel: tpu_custom_call.1
$region0: #{tpu_custom_call.1}
  #allocation0 [shape = 'u32[]', space=smem, size = 0x4, offset = 0x4, fixed_abs, tag = 'smem constant byte address 0x4 - core index']
  #allocation1 [shape = 'u32[72,128]{1,0:T(1,128)}', space=vmem, size = 0x9000, scoped, tag = 'internal scratch']
  #allocation2 [shape = 'f32[1,1]{1,0:T(1,128)}', space=vmem, size = 0x200, scoped, tag = 'scratch operand']
  %s0 = inlined_call_operand.hbm [shape: f32[2048,256], index: 0, kind: input, shape index: {}]
  %s1 = inlined_call_operand.hbm [shape: f32[2048,256], index: 1, kind: input, shape index: {}]
  %s2 = inlined_call_operand.hbm [shape: f32[1,1], index: 2, kind: output, shape index: {}]
  %s3 = sld [smem:[#allocation0]]
  $region57: #{tpu_custom_call.1} parent=0
    _
  %s5 = ssub.s32 1, %s3
  %s6 = scalar_select 0, %s5, %s3
  $region1: #{tpu_custom_call.1} parent=0
    #allocation3 [shape = 'u8[1048576]{0}', space=vmem, size = 0x100000, scoped, tag = 'input window, operand 0']
    #allocation4 [shape = 's32[2]{0}', space=sflag, size = 0x8, scoped, tag = 'scoped memory for tpu_custom_call.1']
    #allocation5 [shape = 's32[2]{0}', space=sflag, size = 0x8, scoped, tag = 'scoped memory for tpu_custom_call.1']
    #allocation6 [shape = 'u8[1048576]{0}', space=vmem, size = 0x100000, scoped, tag = 'input window, operand 1']
    #allocation7 [shape = 's32[2]{0}', space=sflag, size = 0x8, scoped, tag = 'scoped memory for tpu_custom_call.1']
    #allocation8 [shape = 'u8[512]{0}', space=vmem, size = 0x400, scoped, tag = 'output window, operand 0, single buffered']
    %7 = vsyncpa [#allocation4], 0
    %s8 = scalar_lea.sflag [#allocation4], 1
    %9 = vsyncpa %s8, 0
    %10 = vsyncpa [#allocation7], 0
    %s11 = scalar_lea.sflag [#allocation7], 1
    %12 = vsyncpa %s11, 0
    %13 = vsyncpa [#allocation5], 0
    loop: start=0, step=1, limit=6
    $region2: #{tpu_custom_call.1} parent=1 // loop_pre_header
      _
    $region3: #{tpu_custom_call.1} parent=1 // loop_header
      %s15 = sphi 0, %s19
      %p16 = scmp.ge.s32.totalorder %s15, 6
      %s25 = sphi 0, %s27
      %s28 = sphi 0, %s25
      %s29 = sphi 0, %s28
      %s45 = sphi 0, %s29
      %s51 = sphi 0, %s53
      %s54 = sphi 0, %s51
      %s55 = sphi 0, %s54
      %s71 = sphi 0, %s55
      %s75 = sphi 0, %s75
      %s77 = sphi 0, %s75
      %s78 = sphi 0, %s77
      %s92 = sphi 0, %s78
    $region4: #{tpu_custom_call.1} parent=1 // loop_header_branch
      %18 = sbr.rel (%p16) target = $region8
    $region5: #{tpu_custom_call.1} parent=1 // loop_body
      %s20 = ssub.s32 %s15, 1
      %s21 = ssub.s32 %s15, 2
      %s22 = sadd.s32 %s15, 1
      %s23 = ssub.s32 %s15, %s22
      %p24 = scmp.eq.s32.totalorder %s23, 0
      %s26 = sadd.s32 %s25, 1
      %s27 = scalar_select %p24, %s25, %s26
      %p30 = pneg %p24
      %p31 = scmp.eq.s32.totalorder %s15, 3
      %p32 = por %p30, %p31
      %p33 = scmp.ne.s32.totalorder %s25, %s28
      %p34 = scmp.eq.s32.totalorder %s15, 0
      %p35 = por %p33, %p34
      %p36 = scmp.ne.s32.totalorder %s25, %s28
      %p37 = scmp.eq.s32.totalorder %s20, 3
      %p38 = por %p36, %p37
      %p39 = scmp.ne.s32.totalorder %s28, %s29
      %p40 = scmp.eq.s32.totalorder %s20, 0
      %p41 = por %p39, %p40
      %p42 = scmp.ne.s32.totalorder %s28, %s29
      %p43 = scmp.eq.s32.totalorder %s21, 3
      %p44 = por %p42, %p43
      %p46 = scmp.ne.s32.totalorder %s29, %s45
      %p47 = scmp.eq.s32.totalorder %s21, 0
      %p48 = por %p46, %p47
      %s49 = ssub.s32 %s15, %s22
      %p50 = scmp.eq.s32.totalorder %s49, 0
      %s52 = sadd.s32 %s51, 1
      %s53 = scalar_select %p50, %s51, %s52
      %p56 = pneg %p50
      %p57 = scmp.eq.s32.totalorder %s15, 3
      %p58 = por %p56, %p57
      %p59 = scmp.ne.s32.totalorder %s51, %s54
      %p60 = scmp.eq.s32.totalorder %s15, 0
      %p61 = por %p59, %p60
      %p62 = scmp.ne.s32.totalorder %s51, %s54
      %p63 = scmp.eq.s32.totalorder %s20, 3
      %p64 = por %p62, %p63
      %p65 = scmp.ne.s32.totalorder %s54, %s55
      %p66 = scmp.eq.s32.totalorder %s20, 0
      %p67 = por %p65, %p66
      %p68 = scmp.ne.s32.totalorder %s54, %s55
      %p69 = scmp.eq.s32.totalorder %s21, 3
      %p70 = por %p68, %p69
      %p72 = scmp.ne.s32.totalorder %s55, %s71
      %p73 = scmp.eq.s32.totalorder %s21, 0
      %p74 = por %p72, %p73
      %s76 = sadd.s32 %s75, 1
      %p79 = scmp.eq.s32.totalorder %s15, 3
      %p80 = scmp.ne.s32.totalorder %s75, %s77
      %p81 = scmp.eq.s32.totalorder %s15, 0
      %p82 = por %p80, %p81
      %p83 = scmp.ne.s32.totalorder %s75, %s77
      %p84 = scmp.eq.s32.totalorder %s20, 3
      %p85 = por %p83, %p84
      %p86 = scmp.ne.s32.totalorder %s77, %s78
      %p87 = scmp.eq.s32.totalorder %s20, 0
      %p88 = por %p86, %p87
      %p89 = scmp.ne.s32.totalorder %s77, %s78
      %p90 = scmp.eq.s32.totalorder %s21, 3
      %p91 = por %p89, %p90
      %p93 = scmp.ne.s32.totalorder %s78, %s92
      %p94 = scmp.eq.s32.totalorder %s21, 0
      %p95 = por %p93, %p94
      %p96 = scmp.le.s32.totalorder 1, %s15
      %p97 = scmp.lt.s32.totalorder %s15, 5
      %p98 = pnand %p96, %p97
      %p99 = pneg %p98
      // Predicated region
      $region9: #{tpu_custom_call.1} parent=5 // pred_check
        _
      $region10: #{tpu_custom_call.1} parent=5 // pred_check_branch
        %101 = sbr.rel (%p98) target = $region12
      $region11: #{tpu_custom_call.1} parent=5 // pred_region
        %s102 = ssub.s32 %s15, 1
      $region12: #{tpu_custom_call.1} parent=5 // pred_fallthru
        _
      %p103 = scmp.lt.s32.totalorder %s15, 4
      // Predicated region
      $region13: #{tpu_custom_call.1} parent=5 // pred_check
        %p104 = pneg %p103
      $region14: #{tpu_custom_call.1} parent=5 // pred_check_branch
        %106 = sbr.rel (%p104) target = $region16
      $region15: #{tpu_custom_call.1} parent=5 // pred_region
        // Predicated region
        $region17: #{tpu_custom_call.1} parent=15 // pred_check
          %p107 = pneg %p35
        $region18: #{tpu_custom_call.1} parent=15 // pred_check_branch
          %109 = sbr.rel (%p107) target = $region20
        $region19: #{tpu_custom_call.1} parent=15 // pred_region
          %s110 = sand.u32 %s25, 1
          %s111 = scalar_lea.sflag [#allocation4], %s110
          %s112 = sand.u32 %s25, 1
          %s113 = smul.addr %s112, 1024
          %s114 = scalar_lea.vmem [#allocation3], %s113
          %s115 = smul.u32 64, %s15
          %117 = vsyncadd %s111, 0
          %s118 = smul.addr %s115, 2
          %s119 = smul.addr %s118, 8
          %s120 = scalar_lea.hbm %s0, %s119
          %s121 = sshll.u32 %s120, 4
          %s122 = int_to_ptr.hbm [resolvable:$true] %s121
          %s123 = sshll.u32 %s114, 4
          %s124 = int_to_ptr.vmem [resolvable:$true] %s123
          %129 = dma.hbm_to_vmem [thread:$0]  %s122, 16384, %s124, %s111, 256, 256, 16
        $region20: #{tpu_custom_call.1} parent=15 // pred_fallthru
          _
        // Predicated region
        $region21: #{tpu_custom_call.1} parent=15 // pred_check
          %p130 = pneg %p61
        $region22: #{tpu_custom_call.1} parent=15 // pred_check_branch
          %132 = sbr.rel (%p130) target = $region24
        $region23: #{tpu_custom_call.1} parent=15 // pred_region
          %s133 = sand.u32 %s51, 1
          %s134 = scalar_lea.sflag [#allocation7], %s133
          %s135 = sand.u32 %s51, 1
          %s136 = smul.addr %s135, 1024
          %s137 = scalar_lea.vmem [#allocation6], %s136
          %s138 = smul.u32 64, %s15
          %140 = vsyncadd %s134, 0
          %s141 = smul.addr %s138, 2
          %s142 = smul.addr %s141, 8
          %s143 = scalar_lea.hbm %s1, %s142
          %s144 = sshll.u32 %s143, 4
          %s145 = int_to_ptr.hbm [resolvable:$true] %s144
          %s146 = sshll.u32 %s137, 4
          %s147 = int_to_ptr.vmem [resolvable:$true] %s146
          %152 = dma.hbm_to_vmem [thread:$0]  %s145, 16384, %s147, %s134, 256, 256, 16
        $region24: #{tpu_custom_call.1} parent=15 // pred_fallthru
          _
      $region16: #{tpu_custom_call.1} parent=5 // pred_fallthru
        _
      %p153 = scmp.le.s32.totalorder 1, %s15
      %p154 = scmp.lt.s32.totalorder %s15, 5
      %p155 = pnand %p153, %p154
      %p156 = pneg %p155
      // Predicated region
      $region25: #{tpu_custom_call.1} parent=5 // pred_check
        _
      $region26: #{tpu_custom_call.1} parent=5 // pred_check_branch
        %158 = sbr.rel (%p155) target = $region28
      $region27: #{tpu_custom_call.1} parent=5 // pred_region
        %s159 = ssub.s32 %s15, 1
        %s160 = sand.u32 %s28, 1
        %s161 = scalar_lea.sflag [#allocation4], %s160
        %s162 = sand.u32 %s28, 1
        %s163 = smul.addr %s162, 1024
        %s164 = scalar_lea.vmem [#allocation3], %s163
        // Predicated region
        $region29: #{tpu_custom_call.1} parent=27 // pred_check
          %p165 = pneg %p41
        $region30: #{tpu_custom_call.1} parent=27 // pred_check_branch
          %167 = sbr.rel (%p165) target = $region32
        $region31: #{tpu_custom_call.1} parent=27 // pred_region
          %169 = dma.done %s161, 16384
        $region32: #{tpu_custom_call.1} parent=27 // pred_fallthru
          _
        %s170 = sand.u32 %s54, 1
        %s171 = scalar_lea.sflag [#allocation7], %s170
        %s172 = sand.u32 %s54, 1
        %s173 = smul.addr %s172, 1024
        %s174 = scalar_lea.vmem [#allocation6], %s173
        // Predicated region
        $region33: #{tpu_custom_call.1} parent=27 // pred_check
          %p175 = pneg %p67
        $region34: #{tpu_custom_call.1} parent=27 // pred_check_branch
          %177 = sbr.rel (%p175) target = $region36
        $region35: #{tpu_custom_call.1} parent=27 // pred_region
          %179 = dma.done %s171, 16384
        $region36: #{tpu_custom_call.1} parent=27 // pred_fallthru
          _
        %s180 = sand.u32 %s28, 1
        %s181 = scalar_lea.sflag [#allocation4], %s180
        %s182 = sand.u32 %s28, 1
        %s183 = smul.addr %s182, 1024
        %s184 = scalar_lea.vmem [#allocation3], %s183
        %p185 = pneg %p41
        %p186 = pneg %p38
        %s187 = sand.u32 %s54, 1
        %s188 = scalar_lea.sflag [#allocation7], %s187
        %s189 = sand.u32 %s54, 1
        %s190 = smul.addr %s189, 1024
        %s191 = scalar_lea.vmem [#allocation6], %s190
        %p192 = pneg %p67
        %p193 = pneg %p64
        %p194 = pneg %p88
        %p195 = pneg %p85
        %s196 = smul.u32 64, %s20
        %s197 = smul.u32 64, %s20
        %p198 = scmp.eq.s32.totalorder %s20, 0
        // Predicated region
        $region37: #{tpu_custom_call.1} parent=27 // pred_check
          %p199 = pneg %p198
        $region38: #{tpu_custom_call.1} parent=27 // pred_check_branch
          %201 = sbr.rel (%p199) target = $region40
        $region39: #{tpu_custom_call.1} parent=27 // pred_region
          %vm202 = vcmask 0
          %203 = vst.msk [vmem:[#allocation2] sm:$0x1] %vm202, 0.0
        $region40: #{tpu_custom_call.1} parent=27 // pred_fallthru
          _
        %v204 = vld [vmem:[%s164] sm:$0xff]
        %v205 = vld [vmem:[%s164 + $0x8] sm:$0xff]
        %v206 = vld [vmem:[%s164 + $0x10] sm:$0xff]
        %v207 = vld [vmem:[%s164 + $0x18] sm:$0xff]
        %v208 = vld [vmem:[%s164 + $0x20] sm:$0xff]
        %v209 = vld [vmem:[%s164 + $0x28] sm:$0xff]
        %v210 = vld [vmem:[%s164 + $0x30] sm:$0xff]
        %v211 = vld [vmem:[%s164 + $0x38] sm:$0xff]
        %v212 = vld [vmem:[%s164 + $0x40] sm:$0xff]
        %v213 = vld [vmem:[%s164 + $0x48] sm:$0xff]
        %v214 = vld [vmem:[%s164 + $0x50] sm:$0xff]
        %v215 = vld [vmem:[%s164 + $0x58] sm:$0xff]
        %v216 = vld [vmem:[%s164 + $0x60] sm:$0xff]
        %v217 = vld [vmem:[%s164 + $0x68] sm:$0xff]
        %v218 = vld [vmem:[%s164 + $0x70] sm:$0xff]
        %v219 = vld [vmem:[%s164 + $0x78] sm:$0xff]
        %v220 = vld [vmem:[%s164 + $0x80] sm:$0xff]
        %v221 = vld [vmem:[%s164 + $0x88] sm:$0xff]
        %v222 = vld [vmem:[%s164 + $0x90] sm:$0xff]
        %v223 = vld [vmem:[%s164 + $0x98] sm:$0xff]
        %v224 = vld [vmem:[%s164 + $0xa0] sm:$0xff]
        %v225 = vld [vmem:[%s164 + $0xa8] sm:$0xff]
        %v226 = vld [vmem:[%s164 + $0xb0] sm:$0xff]
        %v227 = vld [vmem:[%s164 + $0xb8] sm:$0xff]
        %v228 = vld [vmem:[%s164 + $0xc0] sm:$0xff]
        %v229 = vld [vmem:[%s164 + $0xc8] sm:$0xff]
        %v230 = vld [vmem:[%s164 + $0xd0] sm:$0xff]
        %v231 = vld [vmem:[%s164 + $0xd8] sm:$0xff]
        %v232 = vld [vmem:[%s164 + $0xe0] sm:$0xff]
        %v233 = vld [vmem:[%s164 + $0xe8] sm:$0xff]
        %v234 = vld [vmem:[%s164 + $0xf0] sm:$0xff]
        %v235 = vld [vmem:[%s164 + $0xf8] sm:$0xff]
        %v236 = vld [vmem:[%s164 + $0x100] sm:$0xff]
        %v237 = vld [vmem:[%s164 + $0x108] sm:$0xff]
        %v238 = vld [vmem:[%s164 + $0x110] sm:$0xff]
        %v239 = vld [vmem:[%s164 + $0x118] sm:$0xff]
        %v240 = vld [vmem:[%s164 + $0x120] sm:$0xff]
        %v241 = vld [vmem:[%s164 + $0x128] sm:$0xff]
        %v242 = vld [vmem:[%s164 + $0x130] sm:$0xff]
        %v243 = vld [vmem:[%s164 + $0x138] sm:$0xff]
        %v244 = vld [vmem:[%s164 + $0x140] sm:$0xff]
        %v245 = vld [vmem:[%s164 + $0x148] sm:$0xff]
        %v246 = vld [vmem:[%s164 + $0x150] sm:$0xff]
        %v247 = vld [vmem:[%s164 + $0x158] sm:$0xff]
        %v248 = vld [vmem:[%s164 + $0x160] sm:$0xff]
        %v249 = vld [vmem:[%s164 + $0x168] sm:$0xff]
        %v250 = vld [vmem:[%s164 + $0x170] sm:$0xff]
        %v251 = vld [vmem:[%s164 + $0x178] sm:$0xff]
        %v252 = vld [vmem:[%s164 + $0x180] sm:$0xff]
        %v253 = vld [vmem:[%s164 + $0x188] sm:$0xff]
        %v254 = vld [vmem:[%s164 + $0x190] sm:$0xff]
        %v255 = vld [vmem:[%s164 + $0x198] sm:$0xff]
        %v256 = vld [vmem:[%s164 + $0x1a0] sm:$0xff]
        %v257 = vld [vmem:[%s164 + $0x1a8] sm:$0xff]
        %v258 = vld [vmem:[%s164 + $0x1b0] sm:$0xff]
        %v259 = vld [vmem:[%s164 + $0x1b8] sm:$0xff]
        %v260 = vld [vmem:[%s164 + $0x1c0] sm:$0xff]
        %v261 = vld [vmem:[%s164 + $0x1c8] sm:$0xff]
        %v262 = vld [vmem:[%s164 + $0x1d0] sm:$0xff]
        %v263 = vld [vmem:[%s164 + $0x1d8] sm:$0xff]
        %v264 = vld [vmem:[%s164 + $0x1e0] sm:$0xff]
        %v265 = vld [vmem:[%s164 + $0x1e8] sm:$0xff]
        %v266 = vld [vmem:[%s164 + $0x1f0] sm:$0xff]
        %v267 = vld [vmem:[%s164 + $0x1f8] sm:$0xff]
        %v268 = vld [vmem:[%s164 + $0x200] sm:$0xff]
        %v269 = vld [vmem:[%s164 + $0x208] sm:$0xff]
        %v270 = vld [vmem:[%s164 + $0x210] sm:$0xff]
        %v271 = vld [vmem:[%s164 + $0x218] sm:$0xff]
        %v272 = vld [vmem:[%s164 + $0x220] sm:$0xff]
        %v273 = vld [vmem:[%s164 + $0x228] sm:$0xff]
        %v274 = vld [vmem:[%s164 + $0x230] sm:$0xff]
        %v275 = vld [vmem:[%s164 + $0x238] sm:$0xff]
        %v276 = vld [vmem:[%s164 + $0x240] sm:$0xff]
        %v277 = vld [vmem:[%s164 + $0x248] sm:$0xff]
        %v278 = vld [vmem:[%s164 + $0x250] sm:$0xff]
        %v279 = vld [vmem:[%s164 + $0x258] sm:$0xff]
        %v280 = vld [vmem:[%s164 + $0x260] sm:$0xff]
        %v281 = vld [vmem:[%s164 + $0x268] sm:$0xff]
        %v282 = vld [vmem:[%s164 + $0x270] sm:$0xff]
        %v283 = vld [vmem:[%s164 + $0x278] sm:$0xff]
        %v284 = vld [vmem:[%s164 + $0x280] sm:$0xff]
        %v285 = vld [vmem:[%s164 + $0x288] sm:$0xff]
        %v286 = vld [vmem:[%s164 + $0x290] sm:$0xff]
        %v287 = vld [vmem:[%s164 + $0x298] sm:$0xff]
        %v288 = vld [vmem:[%s164 + $0x2a0] sm:$0xff]
        %v289 = vld [vmem:[%s164 + $0x2a8] sm:$0xff]
        %v290 = vld [vmem:[%s164 + $0x2b0] sm:$0xff]
        %v291 = vld [vmem:[%s164 + $0x2b8] sm:$0xff]
        %v292 = vld [vmem:[%s164 + $0x2c0] sm:$0xff]
        %v293 = vld [vmem:[%s164 + $0x2c8] sm:$0xff]
        %v294 = vld [vmem:[%s164 + $0x2d0] sm:$0xff]
        %v295 = vld [vmem:[%s164 + $0x2d8] sm:$0xff]
        %v296 = vld [vmem:[%s164 + $0x2e0] sm:$0xff]
        %v297 = vld [vmem:[%s164 + $0x2e8] sm:$0xff]
        %v298 = vld [vmem:[%s164 + $0x2f0] sm:$0xff]
        %v299 = vld [vmem:[%s164 + $0x2f8] sm:$0xff]
        %v300 = vld [vmem:[%s164 + $0x300] sm:$0xff]
        %v301 = vld [vmem:[%s164 + $0x308] sm:$0xff]
        %v302 = vld [vmem:[%s164 + $0x310] sm:$0xff]
        %v303 = vld [vmem:[%s164 + $0x318] sm:$0xff]
        %v304 = vld [vmem:[%s164 + $0x320] sm:$0xff]
        %v305 = vld [vmem:[%s164 + $0x328] sm:$0xff]
        %v306 = vld [vmem:[%s164 + $0x330] sm:$0xff]
        %v307 = vld [vmem:[%s164 + $0x338] sm:$0xff]
        %v308 = vld [vmem:[%s164 + $0x340] sm:$0xff]
        %v309 = vld [vmem:[%s164 + $0x348] sm:$0xff]
        %v310 = vld [vmem:[%s164 + $0x350] sm:$0xff]
        %v311 = vld [vmem:[%s164 + $0x358] sm:$0xff]
        %v312 = vld [vmem:[%s164 + $0x360] sm:$0xff]
        %v313 = vld [vmem:[%s164 + $0x368] sm:$0xff]
        %v314 = vld [vmem:[%s164 + $0x370] sm:$0xff]
        %v315 = vld [vmem:[%s164 + $0x378] sm:$0xff]
        %v316 = vld [vmem:[%s164 + $0x380] sm:$0xff]
        %v317 = vld [vmem:[%s164 + $0x388] sm:$0xff]
        %v318 = vld [vmem:[%s164 + $0x390] sm:$0xff]
        %v319 = vld [vmem:[%s164 + $0x398] sm:$0xff]
        %v320 = vld [vmem:[%s164 + $0x3a0] sm:$0xff]
        %v321 = vld [vmem:[%s164 + $0x3a8] sm:$0xff]
        %v322 = vld [vmem:[%s164 + $0x3b0] sm:$0xff]
        %v323 = vld [vmem:[%s164 + $0x3b8] sm:$0xff]
        %v324 = vld [vmem:[%s164 + $0x3c0] sm:$0xff]
        %v325 = vld [vmem:[%s164 + $0x3c8] sm:$0xff]
        %v326 = vld [vmem:[%s164 + $0x3d0] sm:$0xff]
        %v327 = vld [vmem:[%s164 + $0x3d8] sm:$0xff]
        %v328 = vld [vmem:[%s164 + $0x3e0] sm:$0xff]
        %v329 = vld [vmem:[%s164 + $0x3e8] sm:$0xff]
        %v330 = vld [vmem:[%s164 + $0x3f0] sm:$0xff]
        %v331 = vld [vmem:[%s164 + $0x3f8] sm:$0xff]
        %v332 = vld [vmem:[%s174] sm:$0xff]
        %v333 = vld [vmem:[%s174 + $0x8] sm:$0xff]
        %v334 = vld [vmem:[%s174 + $0x10] sm:$0xff]
        %v335 = vld [vmem:[%s174 + $0x18] sm:$0xff]
        %v336 = vld [vmem:[%s174 + $0x20] sm:$0xff]
        %v337 = vld [vmem:[%s174 + $0x28] sm:$0xff]
        %v338 = vld [vmem:[%s174 + $0x30] sm:$0xff]
        %v339 = vld [vmem:[%s174 + $0x38] sm:$0xff]
        %v340 = vld [vmem:[%s174 + $0x40] sm:$0xff]
        %v341 = vld [vmem:[%s174 + $0x48] sm:$0xff]
        %v342 = vld [vmem:[%s174 + $0x50] sm:$0xff]
        %v343 = vld [vmem:[%s174 + $0x58] sm:$0xff]
        %v344 = vld [vmem:[%s174 + $0x60] sm:$0xff]
        %v345 = vld [vmem:[%s174 + $0x68] sm:$0xff]
        %v346 = vld [vmem:[%s174 + $0x70] sm:$0xff]
        %v347 = vld [vmem:[%s174 + $0x78] sm:$0xff]
        %v348 = vld [vmem:[%s174 + $0x80] sm:$0xff]
        %v349 = vld [vmem:[%s174 + $0x88] sm:$0xff]
        %v350 = vld [vmem:[%s174 + $0x90] sm:$0xff]
        %v351 = vld [vmem:[%s174 + $0x98] sm:$0xff]
        %v352 = vld [vmem:[%s174 + $0xa0] sm:$0xff]
        %v353 = vld [vmem:[%s174 + $0xa8] sm:$0xff]
        %v354 = vld [vmem:[%s174 + $0xb0] sm:$0xff]
        %v355 = vld [vmem:[%s174 + $0xb8] sm:$0xff]
        %v356 = vld [vmem:[%s174 + $0xc0] sm:$0xff]
        %v357 = vld [vmem:[%s174 + $0xc8] sm:$0xff]
        %v358 = vld [vmem:[%s174 + $0xd0] sm:$0xff]
        %v359 = vld [vmem:[%s174 + $0xd8] sm:$0xff]
        %v360 = vld [vmem:[%s174 + $0xe0] sm:$0xff]
        %v361 = vld [vmem:[%s174 + $0xe8] sm:$0xff]
        %v362 = vld [vmem:[%s174 + $0xf0] sm:$0xff]
        %v363 = vld [vmem:[%s174 + $0xf8] sm:$0xff]
        %v364 = vld [vmem:[%s174 + $0x100] sm:$0xff]
        %v365 = vld [vmem:[%s174 + $0x108] sm:$0xff]
        %v366 = vld [vmem:[%s174 + $0x110] sm:$0xff]
        %v367 = vld [vmem:[%s174 + $0x118] sm:$0xff]
        %v368 = vld [vmem:[%s174 + $0x120] sm:$0xff]
        %v369 = vld [vmem:[%s174 + $0x128] sm:$0xff]
        %v370 = vld [vmem:[%s174 + $0x130] sm:$0xff]
        %v371 = vld [vmem:[%s174 + $0x138] sm:$0xff]
        %v372 = vld [vmem:[%s174 + $0x140] sm:$0xff]
        %v373 = vld [vmem:[%s174 + $0x148] sm:$0xff]
        %v374 = vld [vmem:[%s174 + $0x150] sm:$0xff]
        %v375 = vld [vmem:[%s174 + $0x158] sm:$0xff]
        %v376 = vld [vmem:[%s174 + $0x160] sm:$0xff]
        %v377 = vld [vmem:[%s174 + $0x168] sm:$0xff]
        %v378 = vld [vmem:[%s174 + $0x170] sm:$0xff]
        %v379 = vld [vmem:[%s174 + $0x178] sm:$0xff]
        %v380 = vld [vmem:[%s174 + $0x180] sm:$0xff]
        %v381 = vld [vmem:[%s174 + $0x188] sm:$0xff]
        %v382 = vld [vmem:[%s174 + $0x190] sm:$0xff]
        %v383 = vld [vmem:[%s174 + $0x198] sm:$0xff]
        %v384 = vld [vmem:[%s174 + $0x1a0] sm:$0xff]
        %v385 = vld [vmem:[%s174 + $0x1a8] sm:$0xff]
        %v386 = vld [vmem:[%s174 + $0x1b0] sm:$0xff]
        %v387 = vld [vmem:[%s174 + $0x1b8] sm:$0xff]
        %v388 = vld [vmem:[%s174 + $0x1c0] sm:$0xff]
        %v389 = vld [vmem:[%s174 + $0x1c8] sm:$0xff]
        %v390 = vld [vmem:[%s174 + $0x1d0] sm:$0xff]
        %v391 = vld [vmem:[%s174 + $0x1d8] sm:$0xff]
        %v392 = vld [vmem:[%s174 + $0x1e0] sm:$0xff]
        %v393 = vld [vmem:[%s174 + $0x1e8] sm:$0xff]
        %v394 = vld [vmem:[%s174 + $0x1f0] sm:$0xff]
        %v395 = vld [vmem:[%s174 + $0x1f8] sm:$0xff]
        %v396 = vld [vmem:[%s174 + $0x200] sm:$0xff]
        %v397 = vld [vmem:[%s174 + $0x208] sm:$0xff]
        %v398 = vld [vmem:[%s174 + $0x210] sm:$0xff]
        %v399 = vld [vmem:[%s174 + $0x218] sm:$0xff]
        %v400 = vld [vmem:[%s174 + $0x220] sm:$0xff]
        %v401 = vld [vmem:[%s174 + $0x228] sm:$0xff]
        %v402 = vld [vmem:[%s174 + $0x230] sm:$0xff]
        %v403 = vld [vmem:[%s174 + $0x238] sm:$0xff]
        %v404 = vld [vmem:[%s174 + $0x240] sm:$0xff]
        %v405 = vld [vmem:[%s174 + $0x248] sm:$0xff]
        %v406 = vld [vmem:[%s174 + $0x250] sm:$0xff]
        %v407 = vld [vmem:[%s174 + $0x258] sm:$0xff]
        %v408 = vld [vmem:[%s174 + $0x260] sm:$0xff]
        %v409 = vld [vmem:[%s174 + $0x268] sm:$0xff]
        %v410 = vld [vmem:[%s174 + $0x270] sm:$0xff]
        %v411 = vld [vmem:[%s174 + $0x278] sm:$0xff]
        %v412 = vld [vmem:[%s174 + $0x280] sm:$0xff]
        %v413 = vld [vmem:[%s174 + $0x288] sm:$0xff]
        %v414 = vld [vmem:[%s174 + $0x290] sm:$0xff]
        %v415 = vld [vmem:[%s174 + $0x298] sm:$0xff]
        %v416 = vld [vmem:[%s174 + $0x2a0] sm:$0xff]
        %v417 = vld [vmem:[%s174 + $0x2a8] sm:$0xff]
        %v418 = vld [vmem:[%s174 + $0x2b0] sm:$0xff]
        %v419 = vld [vmem:[%s174 + $0x2b8] sm:$0xff]
        %v420 = vld [vmem:[%s174 + $0x2c0] sm:$0xff]
        %v421 = vld [vmem:[%s174 + $0x2c8] sm:$0xff]
        %v422 = vld [vmem:[%s174 + $0x2d0] sm:$0xff]
        %v423 = vld [vmem:[%s174 + $0x2d8] sm:$0xff]
        %v424 = vld [vmem:[%s174 + $0x2e0] sm:$0xff]
        %v425 = vld [vmem:[%s174 + $0x2e8] sm:$0xff]
        %v426 = vld [vmem:[%s174 + $0x2f0] sm:$0xff]
        %v427 = vld [vmem:[%s174 + $0x2f8] sm:$0xff]
        %v428 = vld [vmem:[%s174 + $0x300] sm:$0xff]
        %v429 = vld [vmem:[%s174 + $0x308] sm:$0xff]
        %v430 = vld [vmem:[%s174 + $0x310] sm:$0xff]
        %v431 = vld [vmem:[%s174 + $0x318] sm:$0xff]
        %v432 = vld [vmem:[%s174 + $0x320] sm:$0xff]
        %v433 = vld [vmem:[%s174 + $0x328] sm:$0xff]
        %v434 = vld [vmem:[%s174 + $0x330] sm:$0xff]
        %v435 = vld [vmem:[%s174 + $0x338] sm:$0xff]
        %v436 = vld [vmem:[%s174 + $0x340] sm:$0xff]
        %v437 = vld [vmem:[%s174 + $0x348] sm:$0xff]
        %v438 = vld [vmem:[%s174 + $0x350] sm:$0xff]
        %v439 = vld [vmem:[%s174 + $0x358] sm:$0xff]
        %v440 = vld [vmem:[%s174 + $0x360] sm:$0xff]
        %v441 = vld [vmem:[%s174 + $0x368] sm:$0xff]
        %v442 = vld [vmem:[%s174 + $0x370] sm:$0xff]
        %v443 = vld [vmem:[%s174 + $0x378] sm:$0xff]
        %v444 = vld [vmem:[%s174 + $0x380] sm:$0xff]
        %v445 = vld [vmem:[%s174 + $0x388] sm:$0xff]
        %v446 = vld [vmem:[%s174 + $0x390] sm:$0xff]
        %v447 = vld [vmem:[%s174 + $0x398] sm:$0xff]
        %v448 = vld [vmem:[%s174 + $0x3a0] sm:$0xff]
        %v449 = vld [vmem:[%s174 + $0x3a8] sm:$0xff]
        %v450 = vld [vmem:[%s174 + $0x3b0] sm:$0xff]
        %v451 = vld [vmem:[%s174 + $0x3b8] sm:$0xff]
        %v452 = vld [vmem:[%s174 + $0x3c0] sm:$0xff]
        %v453 = vld [vmem:[%s174 + $0x3c8] sm:$0xff]
        %v454 = vld [vmem:[%s174 + $0x3d0] sm:$0xff]
        %v455 = vld [vmem:[%s174 + $0x3d8] sm:$0xff]
        %v456 = vld [vmem:[%s174 + $0x3e0] sm:$0xff]
        %v457 = vld [vmem:[%s174 + $0x3e8] sm:$0xff]
        %v458 = vld [vmem:[%s174 + $0x3f0] sm:$0xff]
        %v459 = vld [vmem:[%s174 + $0x3f8] sm:$0xff]
        %v460 = vsub.f32 %v204, %v332
        %v461 = vsub.f32 %v205, %v333
        %v462 = vsub.f32 %v206, %v334
        %v463 = vsub.f32 %v207, %v335
        %v464 = vsub.f32 %v208, %v336
        %v465 = vsub.f32 %v209, %v337
        %v466 = vsub.f32 %v210, %v338
        %v467 = vsub.f32 %v211, %v339
        %v468 = vsub.f32 %v212, %v340
        %v469 = vsub.f32 %v213, %v341
        %v470 = vsub.f32 %v214, %v342
        %v471 = vsub.f32 %v215, %v343
        %v472 = vsub.f32 %v216, %v344
        %v473 = vsub.f32 %v217, %v345
        %v474 = vsub.f32 %v218, %v346
        %v475 = vsub.f32 %v219, %v347
        %v476 = vsub.f32 %v220, %v348
        %v477 = vsub.f32 %v221, %v349
        %v478 = vsub.f32 %v222, %v350
        %v479 = vsub.f32 %v223, %v351
        %v480 = vsub.f32 %v224, %v352
        %v481 = vsub.f32 %v225, %v353
        %v482 = vsub.f32 %v226, %v354
        %v483 = vsub.f32 %v227, %v355
        %v484 = vsub.f32 %v228, %v356
        %v485 = vsub.f32 %v229, %v357
        %v486 = vsub.f32 %v230, %v358
        %v487 = vsub.f32 %v231, %v359
        %v488 = vsub.f32 %v232, %v360
        %v489 = vsub.f32 %v233, %v361
        %v490 = vsub.f32 %v234, %v362
        %v491 = vsub.f32 %v235, %v363
        %v492 = vsub.f32 %v236, %v364
        %v493 = vsub.f32 %v237, %v365
        %v494 = vsub.f32 %v238, %v366
        %v495 = vsub.f32 %v239, %v367
        %v496 = vsub.f32 %v240, %v368
        %v497 = vsub.f32 %v241, %v369
        %v498 = vsub.f32 %v242, %v370
        %v499 = vsub.f32 %v243, %v371
        %v500 = vsub.f32 %v244, %v372
        %v501 = vsub.f32 %v245, %v373
        %v502 = vsub.f32 %v246, %v374
        %v503 = vsub.f32 %v247, %v375
        %v504 = vsub.f32 %v248, %v376
        %v505 = vsub.f32 %v249, %v377
        %v506 = vsub.f32 %v250, %v378
        %v507 = vsub.f32 %v251, %v379
        %v508 = vsub.f32 %v252, %v380
        %v509 = vsub.f32 %v253, %v381
        %v510 = vsub.f32 %v254, %v382
        %v511 = vsub.f32 %v255, %v383
        %v512 = vsub.f32 %v256, %v384
        %v513 = vsub.f32 %v257, %v385
        %v514 = vsub.f32 %v258, %v386
        %v515 = vsub.f32 %v259, %v387
        %v516 = vsub.f32 %v260, %v388
        %v517 = vsub.f32 %v261, %v389
        %v518 = vsub.f32 %v262, %v390
        %v519 = vsub.f32 %v263, %v391
        %v520 = vsub.f32 %v264, %v392
        %v521 = vsub.f32 %v265, %v393
        %v522 = vsub.f32 %v266, %v394
        %v523 = vsub.f32 %v267, %v395
        %v524 = vsub.f32 %v268, %v396
        %v525 = vsub.f32 %v269, %v397
        %v526 = vsub.f32 %v270, %v398
        %v527 = vsub.f32 %v271, %v399
        %v528 = vsub.f32 %v272, %v400
        %v529 = vsub.f32 %v273, %v401
        %v530 = vsub.f32 %v274, %v402
        %v531 = vsub.f32 %v275, %v403
        %v532 = vsub.f32 %v276, %v404
        %v533 = vsub.f32 %v277, %v405
        %v534 = vsub.f32 %v278, %v406
        %v535 = vsub.f32 %v279, %v407
        %v536 = vsub.f32 %v280, %v408
        %v537 = vsub.f32 %v281, %v409
        %v538 = vsub.f32 %v282, %v410
        %v539 = vsub.f32 %v283, %v411
        %v540 = vsub.f32 %v284, %v412
        %v541 = vsub.f32 %v285, %v413
        %v542 = vsub.f32 %v286, %v414
        %v543 = vsub.f32 %v287, %v415
        %v544 = vsub.f32 %v288, %v416
        %v545 = vsub.f32 %v289, %v417
        %v546 = vsub.f32 %v290, %v418
        %v547 = vsub.f32 %v291, %v419
        %v548 = vsub.f32 %v292, %v420
        %v549 = vsub.f32 %v293, %v421
        %v550 = vsub.f32 %v294, %v422
        %v551 = vsub.f32 %v295, %v423
        %v552 = vsub.f32 %v296, %v424
        %v553 = vsub.f32 %v297, %v425
        %v554 = vsub.f32 %v298, %v426
        %v555 = vsub.f32 %v299, %v427
        %v556 = vsub.f32 %v300, %v428
        %v557 = vsub.f32 %v301, %v429
        %v558 = vsub.f32 %v302, %v430
        %v559 = vsub.f32 %v303, %v431
        %v560 = vsub.f32 %v304, %v432
        %v561 = vsub.f32 %v305, %v433
        %v562 = vsub.f32 %v306, %v434
        %v563 = vsub.f32 %v307, %v435
        %v564 = vsub.f32 %v308, %v436
        %v565 = vsub.f32 %v309, %v437
        %v566 = vsub.f32 %v310, %v438
        %v567 = vsub.f32 %v311, %v439
        %v568 = vsub.f32 %v312, %v440
        %v569 = vsub.f32 %v313, %v441
        %v570 = vsub.f32 %v314, %v442
        %v571 = vsub.f32 %v315, %v443
        %v572 = vsub.f32 %v316, %v444
        %v573 = vsub.f32 %v317, %v445
        %v574 = vsub.f32 %v318, %v446
        %v575 = vsub.f32 %v319, %v447
        %v576 = vsub.f32 %v320, %v448
        %v577 = vsub.f32 %v321, %v449
        %v578 = vsub.f32 %v322, %v450
        %v579 = vsub.f32 %v323, %v451
        %v580 = vsub.f32 %v324, %v452
        %v581 = vsub.f32 %v325, %v453
        %v582 = vsub.f32 %v326, %v454
        %v583 = vsub.f32 %v327, %v455
        %v584 = vsub.f32 %v328, %v456
        %v585 = vsub.f32 %v329, %v457
        %v586 = vsub.f32 %v330, %v458
        %v587 = vsub.f32 %v331, %v459
        %v588 = vld [vmem:[#allocation2] sm:$0x1]
        %v589 = vmul.f32 %v460, %v460
        %v590 = vmul.f32 %v461, %v461
        %v591 = vmul.f32 %v462, %v462
        %v592 = vmul.f32 %v463, %v463
        %v593 = vmul.f32 %v464, %v464
        %v594 = vmul.f32 %v465, %v465
        %v595 = vmul.f32 %v466, %v466
        %v596 = vmul.f32 %v467, %v467
        %v597 = vmul.f32 %v468, %v468
        %v598 = vmul.f32 %v469, %v469
        %v599 = vmul.f32 %v470, %v470
        %v600 = vmul.f32 %v471, %v471
        %v601 = vmul.f32 %v472, %v472
        %v602 = vmul.f32 %v473, %v473
        %v603 = vmul.f32 %v474, %v474
        %v604 = vmul.f32 %v475, %v475
        %v605 = vmul.f32 %v476, %v476
        %v606 = vmul.f32 %v477, %v477
        %v607 = vmul.f32 %v478, %v478
        %v608 = vmul.f32 %v479, %v479
        %v609 = vmul.f32 %v480, %v480
        %v610 = vmul.f32 %v481, %v481
        %v611 = vmul.f32 %v482, %v482
        %v612 = vmul.f32 %v483, %v483
        %v613 = vmul.f32 %v484, %v484
        %v614 = vmul.f32 %v485, %v485
        %v615 = vmul.f32 %v486, %v486
        %v616 = vmul.f32 %v487, %v487
        %v617 = vmul.f32 %v488, %v488
        %v618 = vmul.f32 %v489, %v489
        %v619 = vmul.f32 %v490, %v490
        %v620 = vmul.f32 %v491, %v491
        %v621 = vmul.f32 %v492, %v492
        %v622 = vmul.f32 %v493, %v493
        %v623 = vmul.f32 %v494, %v494
        %v624 = vmul.f32 %v495, %v495
        %v625 = vmul.f32 %v496, %v496
        %v626 = vmul.f32 %v497, %v497
        %v627 = vmul.f32 %v498, %v498
        %v628 = vmul.f32 %v499, %v499
        %v629 = vmul.f32 %v500, %v500
        %v630 = vmul.f32 %v501, %v501
        %v631 = vmul.f32 %v502, %v502
        %v632 = vmul.f32 %v503, %v503
        %v633 = vmul.f32 %v504, %v504
        %v634 = vmul.f32 %v505, %v505
        %v635 = vmul.f32 %v506, %v506
        %v636 = vmul.f32 %v507, %v507
        %v637 = vmul.f32 %v508, %v508
        %v638 = vmul.f32 %v509, %v509
        %v639 = vmul.f32 %v510, %v510
        %v640 = vmul.f32 %v511, %v511
        %v641 = vmul.f32 %v512, %v512
        %v642 = vmul.f32 %v513, %v513
        %v643 = vmul.f32 %v514, %v514
        %v644 = vmul.f32 %v515, %v515
        %v645 = vmul.f32 %v516, %v516
        %v646 = vmul.f32 %v517, %v517
        %v647 = vmul.f32 %v518, %v518
        %v648 = vmul.f32 %v519, %v519
        %v649 = vmul.f32 %v520, %v520
        %v650 = vmul.f32 %v521, %v521
        %v651 = vmul.f32 %v522, %v522
        %v652 = vmul.f32 %v523, %v523
        %v653 = vmul.f32 %v524, %v524
        %v654 = vmul.f32 %v525, %v525
        %v655 = vmul.f32 %v526, %v526
        %v656 = vmul.f32 %v527, %v527
        %v657 = vmul.f32 %v528, %v528
        %v658 = vmul.f32 %v529, %v529
        %v659 = vmul.f32 %v530, %v530
        %v660 = vmul.f32 %v531, %v531
        %v661 = vmul.f32 %v532, %v532
        %v662 = vmul.f32 %v533, %v533
        %v663 = vmul.f32 %v534, %v534
        %v664 = vmul.f32 %v535, %v535
        %v665 = vmul.f32 %v536, %v536
        %v666 = vmul.f32 %v537, %v537
        %v667 = vmul.f32 %v538, %v538
        %v668 = vmul.f32 %v539, %v539
        %v669 = vmul.f32 %v540, %v540
        %v670 = vmul.f32 %v541, %v541
        %v671 = vmul.f32 %v542, %v542
        %v672 = vmul.f32 %v543, %v543
        %v673 = vmul.f32 %v544, %v544
        %v674 = vmul.f32 %v545, %v545
        %v675 = vmul.f32 %v546, %v546
        %v676 = vmul.f32 %v547, %v547
        %v677 = vmul.f32 %v548, %v548
        %v678 = vmul.f32 %v549, %v549
        %v679 = vmul.f32 %v550, %v550
        %v680 = vmul.f32 %v551, %v551
        %v681 = vmul.f32 %v552, %v552
        %v682 = vmul.f32 %v553, %v553
        %v683 = vmul.f32 %v554, %v554
        %v684 = vmul.f32 %v555, %v555
        %v685 = vmul.f32 %v556, %v556
        %v686 = vmul.f32 %v557, %v557
        %v687 = vmul.f32 %v558, %v558
        %v688 = vmul.f32 %v559, %v559
        %v689 = vmul.f32 %v560, %v560
        %v690 = vmul.f32 %v561, %v561
        %v691 = vmul.f32 %v562, %v562
        %v692 = vmul.f32 %v563, %v563
        %v693 = vmul.f32 %v564, %v564
        %v694 = vmul.f32 %v565, %v565
        %v695 = vmul.f32 %v566, %v566
        %v696 = vmul.f32 %v567, %v567
        %v697 = vmul.f32 %v568, %v568
        %v698 = vmul.f32 %v569, %v569
        %v699 = vmul.f32 %v570, %v570
        %v700 = vmul.f32 %v571, %v571
        %v701 = vmul.f32 %v572, %v572
        %v702 = vmul.f32 %v573, %v573
        %v703 = vmul.f32 %v574, %v574
        %v704 = vmul.f32 %v575, %v575
        %v705 = vmul.f32 %v576, %v576
        %v706 = vmul.f32 %v577, %v577
        %v707 = vmul.f32 %v578, %v578
        %v708 = vmul.f32 %v579, %v579
        %v709 = vmul.f32 %v580, %v580
        %v710 = vmul.f32 %v581, %v581
        %v711 = vmul.f32 %v582, %v582
        %v712 = vmul.f32 %v583, %v583
        %v713 = vmul.f32 %v584, %v584
        %v714 = vmul.f32 %v585, %v585
        %v715 = vmul.f32 %v586, %v586
        %v716 = vmul.f32 %v587, %v587
        %v717 = vadd.f32 %v589, %v590
        %v718 = vadd.f32 %v717, %v591
        %v719 = vadd.f32 %v718, %v592
        %v720 = vadd.f32 %v719, %v593
        %v721 = vadd.f32 %v720, %v594
        %v722 = vadd.f32 %v721, %v595
        %v723 = vadd.f32 %v722, %v596
        %v724 = vadd.f32 %v723, %v597
        %v725 = vadd.f32 %v724, %v598
        %v726 = vadd.f32 %v725, %v599
        %v727 = vadd.f32 %v726, %v600
        %v728 = vadd.f32 %v727, %v601
        %v729 = vadd.f32 %v728, %v602
        %v730 = vadd.f32 %v729, %v603
        %v731 = vadd.f32 %v730, %v604
        %v732 = vadd.f32 %v731, %v605
        %v733 = vadd.f32 %v732, %v606
        %v734 = vadd.f32 %v733, %v607
        %v735 = vadd.f32 %v734, %v608
        %v736 = vadd.f32 %v735, %v609
        %v737 = vadd.f32 %v736, %v610
        %v738 = vadd.f32 %v737, %v611
        %v739 = vadd.f32 %v738, %v612
        %v740 = vadd.f32 %v739, %v613
        %v741 = vadd.f32 %v740, %v614
        %v742 = vadd.f32 %v741, %v615
        %v743 = vadd.f32 %v742, %v616
        %v744 = vadd.f32 %v743, %v617
        %v745 = vadd.f32 %v744, %v618
        %v746 = vadd.f32 %v745, %v619
        %v747 = vadd.f32 %v746, %v620
        %v748 = vadd.f32 %v747, %v621
        %v749 = vadd.f32 %v748, %v622
        %v750 = vadd.f32 %v749, %v623
        %v751 = vadd.f32 %v750, %v624
        %v752 = vadd.f32 %v751, %v625
        %v753 = vadd.f32 %v752, %v626
        %v754 = vadd.f32 %v753, %v627
        %v755 = vadd.f32 %v754, %v628
        %v756 = vadd.f32 %v755, %v629
        %v757 = vadd.f32 %v756, %v630
        %v758 = vadd.f32 %v757, %v631
        %v759 = vadd.f32 %v758, %v632
        %v760 = vadd.f32 %v759, %v633
        %v761 = vadd.f32 %v760, %v634
        %v762 = vadd.f32 %v761, %v635
        %v763 = vadd.f32 %v762, %v636
        %v764 = vadd.f32 %v763, %v637
        %v765 = vadd.f32 %v764, %v638
        %v766 = vadd.f32 %v765, %v639
        %v767 = vadd.f32 %v766, %v640
        %v768 = vadd.f32 %v767, %v641
        %v769 = vadd.f32 %v768, %v642
        %v770 = vadd.f32 %v769, %v643
        %v771 = vadd.f32 %v770, %v644
        %v772 = vadd.f32 %v771, %v645
        %v773 = vadd.f32 %v772, %v646
        %v774 = vadd.f32 %v773, %v647
        %v775 = vadd.f32 %v774, %v648
        %v776 = vadd.f32 %v775, %v649
        %v777 = vadd.f32 %v776, %v650
        %v778 = vadd.f32 %v777, %v651
        %v779 = vadd.f32 %v778, %v652
        %v780 = vadd.f32 %v779, %v653
        %v781 = vadd.f32 %v780, %v654
        %v782 = vadd.f32 %v781, %v655
        %v783 = vadd.f32 %v782, %v656
        %v784 = vadd.f32 %v783, %v657
        %v785 = vadd.f32 %v784, %v658
        %v786 = vadd.f32 %v785, %v659
        %v787 = vadd.f32 %v786, %v660
        %v788 = vadd.f32 %v787, %v661
        %v789 = vadd.f32 %v788, %v662
        %v790 = vadd.f32 %v789, %v663
        %v791 = vadd.f32 %v790, %v664
        %v792 = vadd.f32 %v791, %v665
        %v793 = vadd.f32 %v792, %v666
        %v794 = vadd.f32 %v793, %v667
        %v795 = vadd.f32 %v794, %v668
        %v796 = vadd.f32 %v795, %v669
        %v797 = vadd.f32 %v796, %v670
        %v798 = vadd.f32 %v797, %v671
        %v799 = vadd.f32 %v798, %v672
        %v800 = vadd.f32 %v799, %v673
        %v801 = vadd.f32 %v800, %v674
        %v802 = vadd.f32 %v801, %v675
        %v803 = vadd.f32 %v802, %v676
        %v804 = vadd.f32 %v803, %v677
        %v805 = vadd.f32 %v804, %v678
        %v806 = vadd.f32 %v805, %v679
        %v807 = vadd.f32 %v806, %v680
        %v808 = vadd.f32 %v807, %v681
        %v809 = vadd.f32 %v808, %v682
        %v810 = vadd.f32 %v809, %v683
        %v811 = vadd.f32 %v810, %v684
        %v812 = vadd.f32 %v811, %v685
        %v813 = vadd.f32 %v812, %v686
        %v814 = vadd.f32 %v813, %v687
        %v815 = vadd.f32 %v814, %v688
        %v816 = vadd.f32 %v815, %v689
        %v817 = vadd.f32 %v816, %v690
        %v818 = vadd.f32 %v817, %v691
        %v819 = vadd.f32 %v818, %v692
        %v820 = vadd.f32 %v819, %v693
        %v821 = vadd.f32 %v820, %v694
        %v822 = vadd.f32 %v821, %v695
        %v823 = vadd.f32 %v822, %v696
        %v824 = vadd.f32 %v823, %v697
        %v825 = vadd.f32 %v824, %v698
        %v826 = vadd.f32 %v825, %v699
        %v827 = vadd.f32 %v826, %v700
        %v828 = vadd.f32 %v827, %v701
        %v829 = vadd.f32 %v828, %v702
        %v830 = vadd.f32 %v829, %v703
        %v831 = vadd.f32 %v830, %v704
        %v832 = vadd.f32 %v831, %v705
        %v833 = vadd.f32 %v832, %v706
        %v834 = vadd.f32 %v833, %v707
        %v835 = vadd.f32 %v834, %v708
        %v836 = vadd.f32 %v835, %v709
        %v837 = vadd.f32 %v836, %v710
        %v838 = vadd.f32 %v837, %v711
        %v839 = vadd.f32 %v838, %v712
        %v840 = vadd.f32 %v839, %v713
        %v841 = vadd.f32 %v840, %v714
        %v842 = vadd.f32 %v841, %v715
        %v843 = vadd.f32 %v842, %v716
        %844 = vadd.xlane.f32.xlu0 %v843
        %v845 = vpop.xlane.xlu0 %844
        %v846 = vrot.slane %v845, 4
        %v847 = vadd.f32 %v845, %v846
        %v848 = vrot.slane %v847, 2
        %v849 = vadd.f32 %v847, %v848
        %v850 = vrot.slane %v849, 1
        %v851 = vadd.f32 %v849, %v850
        %s852 = vtos %v851
        %v853 = vstv %s852
        %v854 = vadd.f32 %v588, %v853
        %vm855 = vcmask 0
        %856 = vst.msk [vmem:[#allocation2] sm:$0x1] %vm855, %v854
        %p857 = scmp.eq.s32.totalorder %s20, 3
        // Predicated region
        $region41: #{tpu_custom_call.1} parent=27 // pred_check
          %p858 = pneg %p857
        $region42: #{tpu_custom_call.1} parent=27 // pred_check_branch
          %860 = sbr.rel (%p858) target = $region44
        $region43: #{tpu_custom_call.1} parent=27 // pred_region
          %v861 = vld [vmem:[#allocation2] sm:$0x1]
          %v862 = vmul.f32 %v861, 1.9073486e-06
          %863 = vst.msk [vmem:[#allocation8] sm:$0x1] %vm855, %v862
        $region44: #{tpu_custom_call.1} parent=27 // pred_fallthru
          _
        // Predicated region
        $region45: #{tpu_custom_call.1} parent=27 // pred_check
          %p864 = pneg %p85
        $region46: #{tpu_custom_call.1} parent=27 // pred_check_branch
          %866 = sbr.rel (%p864) target = $region48
        $region47: #{tpu_custom_call.1} parent=27 // pred_region
          %868 = vsyncadd [#allocation5], 0
          %s870 = sshll.u32 [#allocation8], 4
          %s871 = int_to_ptr.vmem [resolvable:$true] %s870
          %s872 = sshll.u32 %s2, 4
          %s873 = int_to_ptr.hbm [resolvable:$true] %s872
          %875 = dma.vmem_to_hbm [thread:$0]  %s871, 16, %s873, [#allocation5]
        $region48: #{tpu_custom_call.1} parent=27 // pred_fallthru
          _
        // Predicated region
        $region49: #{tpu_custom_call.1} parent=27 // pred_check
          %p876 = pneg %p85
        $region50: #{tpu_custom_call.1} parent=27 // pred_check_branch
          %878 = sbr.rel (%p876) target = $region52
        $region51: #{tpu_custom_call.1} parent=27 // pred_region
          %880 = dma.done [#allocation5], 16
        $region52: #{tpu_custom_call.1} parent=27 // pred_fallthru
          _
      $region28: #{tpu_custom_call.1} parent=5 // pred_fallthru
        _
      %p881 = scmp.le.s32.totalorder 2, %s15
      // Predicated region
      $region53: #{tpu_custom_call.1} parent=5 // pred_check
        %p882 = pneg %p881
      $region54: #{tpu_custom_call.1} parent=5 // pred_check_branch
        %884 = sbr.rel (%p882) target = $region56
      $region55: #{tpu_custom_call.1} parent=5 // pred_region
        %s885 = ssub.s32 %s15, 2
      $region56: #{tpu_custom_call.1} parent=5 // pred_fallthru
        _
    $region6: #{tpu_custom_call.1} parent=1 // loop_footer
      %s19 = sadd.s32 1, %s15
    $region7: #{tpu_custom_call.1} parent=1 // loop_footer_branch
      %14 = sbr.rel target = $region3
    $region8: #{tpu_custom_call.1} parent=1 // loop_exit
      _
    %886 = vsyncpa [#allocation4], 1
    %s887 = scalar_lea.sflag [#allocation4], 1
    %888 = vsyncpa %s887, 1
    %889 = vsyncpa [#allocation7], 1
    %s890 = scalar_lea.sflag [#allocation7], 1
    %891 = vsyncpa %s890, 1
    %892 = vsyncpa [#allocation5], 1
    %s893 = scalar_lea.sflag [#allocation5], 1
    %894 = vsyncpa %s893, 1

</llo_original>
